<compile_context>
chip_gen: v7x
topology: tpu7x:2x2x1
jax: 0.10.0
libtpu: 0.0.40
codegen_flags: <defaults>
</compile_context>

<pallas_src>
import functools

import jax
import jax.numpy as jnp
from jax.experimental import pallas as pl
from jax.experimental.pallas import tpu as pltpu

N_P = 512  # matches nn module's n_p


# ----------------------------------------------------------------------------
# Deterministic parameter init (shapes from Agent.__init__).  Only `scale`
# participates in forward(); the rest are built for completeness.
# ----------------------------------------------------------------------------
def init_agent_params(key, n_p=N_P):
    ks = jax.random.split(key, 4)

    def linear(k, fan_in, fan_out):
        bound = 1.0 / (fan_in ** 0.5)
        kw, kb = jax.random.split(k)
        w = jax.random.uniform(kw, (fan_out, fan_in), jnp.float32, -bound, bound)
        b = jax.random.uniform(kb, (fan_out,), jnp.float32, -bound, bound)
        return w, b

    params = {
        "encoder": linear(ks[0], n_p, 512),
        "decoder": linear(ks[1], 512, n_p),
        "fc_gen1": linear(ks[2], n_p, 1024),
        "fc_gen2": linear(ks[3], 1024, 1),
        "bn_coder": (jnp.ones((512,), jnp.float32), jnp.zeros((512,), jnp.float32)),
        "bn_gen": (jnp.ones((1024,), jnp.float32), jnp.zeros((1024,), jnp.float32)),
        "lr": jnp.ones((n_p,), jnp.float32),
        "scale": jnp.array([1.0], jnp.float32),  # torch.FloatTensor([1.0])
    }
    return params


# ----------------------------------------------------------------------------
# Pallas kernel: one grid step covers B_blk batch elements.  Computes the
# (B_blk, n, m) squared-distance tensor via the Gram-matrix identity so the
# dominant O(n*m*dims) work runs on the MXU.
# ----------------------------------------------------------------------------
def _agent_fwd_kernel(scale_ref, q_ref, p_ref, out_ref, *, inv_norm):
    # Cast inside the kernel (inputs arrive in their native dtype).
    q = q_ref[...].astype(jnp.float32)  # (B_blk, n, d)
    p = p_ref[...].astype(jnp.float32)  # (B_blk, m, d)

    # Fold normalize (1/dims) and the learnable scale into one scalar.
    alpha = scale_ref[0] * inv_norm

    # ||q||^2 per row -> (B_blk, n, 1): lane-axis reduce, broadcasts along lanes.
    q_sq = jnp.sum(q * q, axis=-1, keepdims=True)

    # ||p||^2 as a (B_blk, 1, m) row vector, produced directly in the right
    # orientation via a tiny batched MXU matmul against a ones-row (avoids a
    # sublane->lane transpose on the XLU).
    ones_row = jnp.ones((q.shape[0], 1, q.shape[-1]), jnp.float32)
    p_sq = jnp.einsum("bod,bmd->bom", ones_row, p * p,
                      preferred_element_type=jnp.float32)  # (B_blk, 1, m)

    # Cross term q @ p.T on the MXU (batched, contracting the feature axis).
    cross = jnp.einsum("bnd,bmd->bnm", q, p,
                       preferred_element_type=jnp.float32)  # (B_blk, n, m)

    # ||q - p||^2 = ||q||^2 + ||p||^2 - 2 q.p ; clamp tiny negative FP residue
    # (the direct sum-of-squares reference is >= 0 by construction).
    logits = jnp.maximum(q_sq + p_sq - 2.0 * cross, 0.0)
    out_ref[...] = (alpha * logits).astype(out_ref.dtype)


def _choose_batch_block(bs, n, m, d, in_itemsize):
    """Largest divisor of bs fitting a small VMEM budget, keeping >=2 grid steps."""
    budget = 4 * 1024 * 1024  # 4 MiB per grid step (double-buffered), v7x-safe
    per_batch = 2 * in_itemsize * (n * d + m * d) + 2 * 4 * n * m
    best = 1
    for cand in range(1, bs + 1):
        if bs % cand != 0:
            continue
        steps = bs // cand
        if bs >= 2 and steps < 2:
            continue  # keep >= 2 parallel grid steps so v7x uses both TCs
        if cand * per_batch > budget:
            continue
        best = cand
    return best


def agent_forward(params, prototypes, masktypes, query, support, support_labels,
                  n_way, n_shot, normalize=True):
    """Pallas implementation of Agent.forward (only prototypes/query/scale matter)."""
    del masktypes, support, support_labels, n_way, n_shot  # unused by forward()
    bs, m, dims = prototypes.shape
    _, n, _ = query.shape
    scale = params["scale"].astype(jnp.float32)

    inv_norm = (1.0 / float(dims)) if normalize else 1.0
    kernel = functools.partial(_agent_fwd_kernel, inv_norm=inv_norm)

    in_itemsize = max(query.dtype.itemsize, prototypes.dtype.itemsize)
    b_blk = _choose_batch_block(bs, n, m, dims, in_itemsize)

    # Advisory cost hint: this is a tiny, launch-latency-dominated custom call.
    cost = pl.CostEstimate(
        flops=2 * bs * n * m * dims,
        transcendentals=0,
        bytes_accessed=(query.size * query.dtype.itemsize
                        + prototypes.size * prototypes.dtype.itemsize
                        + bs * n * m * 4),
    )

    out = pl.pallas_call(
        kernel,
        out_shape=jax.ShapeDtypeStruct((bs, n, m), jnp.float32),
        grid=(bs // b_blk,),
        in_specs=[
            # scalar `scale` lives in SMEM, untiled
            pl.BlockSpec(memory_space=pltpu.MemorySpace.SMEM),
            # per-step query tile -> kernel sees (b_blk, n, dims); full n/dims
            # extents, so exempt from the (8,128) block-tiling rule.
            pl.BlockSpec((b_blk, n, dims), lambda b: (b, 0, 0)),
            # per-step prototype tile -> kernel sees (b_blk, m, dims)
            pl.BlockSpec((b_blk, m, dims), lambda b: (b, 0, 0)),
        ],
        out_specs=pl.BlockSpec((b_blk, n, m), lambda b: (b, 0, 0)),
        compiler_params=pltpu.CompilerParams(
            dimension_semantics=("parallel",)),
        cost_estimate=cost,
    )(scale, query, prototypes)

    return out


# ----------------------------------------------------------------------------
# Pure-JAX reference (for a sanity check against the kernel).
# ----------------------------------------------------------------------------
def agent_forward_ref(params, prototypes, query, normalize=True):
    diff = (query.astype(jnp.float32)[:, :, None, :]
            - prototypes.astype(jnp.float32)[:, None, :, :])
    logits = jnp.sum(diff * diff, axis=-1)
    if normalize:
        logits = logits / prototypes.shape[-1]
    return params["scale"][0] * logits


if __name__ == "__main__":
    key = jax.random.PRNGKey(0)
    k_params, k_proto, k_query, k_support = jax.random.split(key, 4)

    bs, n_way, n_shot = 2, 4, 1
    n_query, dims = 8, N_P  # dims == n_p == 512

    params = init_agent_params(k_params)

    prototypes = jax.random.normal(k_proto, (bs, n_way, dims), jnp.float32)
    query = jax.random.normal(k_query, (bs, n_query, dims), jnp.float32)
    support = jax.random.normal(k_support, (bs, n_way * n_shot, dims), jnp.float32)
    support_labels = jnp.tile(jnp.arange(n_way), (bs, n_shot)).astype(jnp.int32)
    masktypes = jnp.ones((bs, n_way, dims), jnp.float32)

    out = agent_forward(params, prototypes, masktypes, query, support,
                        support_labels, n_way, n_shot, normalize=True)
    out = jax.block_until_ready(out)

    ref = agent_forward_ref(params, prototypes, query, normalize=True)
    assert out.shape == (bs, n_query, n_way)
    assert jnp.allclose(out, ref, rtol=1e-4, atol=1e-4), "kernel mismatch vs reference"

    print("KERNEL_OK")
</pallas_src>

<mosaic_0001>
module attributes {stable_mosaic.version = 11 : i64} {
  func.func @_agent_fwd_kernel(%arg0: i32, %arg1: memref<1xf32, #tpu.memory_space<smem>>, %arg2: memref<1x8x512xf32, #tpu.memory_space<vmem>>, %arg3: memref<1x4x512xf32, #tpu.memory_space<vmem>>, %arg4: memref<1x8x4xf32, #tpu.memory_space<vmem>>) attributes {dimension_semantics = [#tpu.dimension_semantics<parallel>], iteration_bounds = array<i64: 2>, scalar_prefetch = 0 : i64, scratch_operands = 0 : i64, tpu.core_type = #tpu.core_type<tc>, window_params = [{transform_indices = @transform_0, window_bounds = array<i64: 1>}, {transform_indices = @transform_1, window_bounds = array<i64: 1, 8, 512>}, {transform_indices = @transform_2, window_bounds = array<i64: 1, 4, 512>}, {transform_indices = @transform_3, window_bounds = array<i64: 1, 8, 4>}]} {
    %c0 = arith.constant 0 : index
    %c0_0 = arith.constant 0 : index
    %c0_1 = arith.constant 0 : index
    %0 = vector.load %arg2[%c0, %c0_0, %c0_1] : memref<1x8x512xf32, #tpu.memory_space<vmem>>, vector<1x8x512xf32>
    %c0_2 = arith.constant 0 : index
    %c0_3 = arith.constant 0 : index
    %c0_4 = arith.constant 0 : index
    %1 = vector.load %arg3[%c0_2, %c0_3, %c0_4] : memref<1x4x512xf32, #tpu.memory_space<vmem>>, vector<1x4x512xf32>
    %c0_5 = arith.constant 0 : index
    %2 = memref.load %arg1[%c0_5] : memref<1xf32, #tpu.memory_space<smem>>
    %cst = arith.constant 0.001953125 : f32
    %3 = arith.mulf %2, %cst : f32
    %4 = arith.mulf %0, %0 : vector<1x8x512xf32>
    %cst_6 = arith.constant dense<0.000000e+00> : vector<1x8xf32>
    %5 = vector.multi_reduction <add>, %4, %cst_6 [2] : vector<1x8x512xf32> to vector<1x8xf32>
    %6 = vector.shape_cast %5 : vector<1x8xf32> to vector<1x8x1xf32>
    %cst_7 = arith.constant 1.000000e+00 : f32
    %7 = vector.broadcast %cst_7 : f32 to vector<1x1x512xf32>
    %8 = arith.mulf %1, %1 : vector<1x4x512xf32>
    "tpu.trace_start"() <{level = 10 : i32, message = "bod,bmd->bom"}> : () -> ()
    %cst_8 = arith.constant dense<0.000000e+00> : vector<1x1x4xf32>
    %9 = tpu.matmul %7, %8, %cst_8 {dimension_numbers = #tpu.dot_dimension_numbers<[2], [2], [1], [1], [0, 0, 0, 1, 1, 1], [0], [0]>} : vector<1x1x512xf32>, vector<1x4x512xf32>, vector<1x1x4xf32> -> vector<1x1x4xf32>
    "tpu.trace_stop"() : () -> ()
    "tpu.trace_start"() <{level = 10 : i32, message = "bnd,bmd->bnm"}> : () -> ()
    %cst_9 = arith.constant dense<0.000000e+00> : vector<1x8x4xf32>
    %10 = tpu.matmul %0, %1, %cst_9 {dimension_numbers = #tpu.dot_dimension_numbers<[2], [2], [1], [1], [0, 0, 0, 1, 1, 1], [0], [0]>} : vector<1x8x512xf32>, vector<1x4x512xf32>, vector<1x8x4xf32> -> vector<1x8x4xf32>
    "tpu.trace_stop"() : () -> ()
    %11 = vector.broadcast %6 : vector<1x8x1xf32> to vector<1x8x4xf32>
    %12 = vector.broadcast %9 : vector<1x1x4xf32> to vector<1x8x4xf32>
    %13 = arith.addf %11, %12 : vector<1x8x4xf32>
    %cst_10 = arith.constant 2.000000e+00 : f32
    %14 = vector.broadcast %cst_10 : f32 to vector<1x8x4xf32>
    %15 = arith.mulf %14, %10 : vector<1x8x4xf32>
    %16 = arith.subf %13, %15 : vector<1x8x4xf32>
    %cst_11 = arith.constant 0.000000e+00 : f32
    %17 = vector.broadcast %cst_11 : f32 to vector<1x8x4xf32>
    %18 = arith.maximumf %16, %17 : vector<1x8x4xf32>
    %19 = vector.broadcast %3 : f32 to vector<1x8x4xf32>
    %20 = arith.mulf %19, %18 : vector<1x8x4xf32>
    %c0_12 = arith.constant 0 : index
    %c0_13 = arith.constant 0 : index
    %c0_14 = arith.constant 0 : index
    %21 = vector.load %arg4[%c0_12, %c0_13, %c0_14] : memref<1x8x4xf32, #tpu.memory_space<vmem>>, vector<1x8x4xf32>
    tpu.vector_store %arg4[%c0_12, %c0_13, %c0_14], %20 {strides = array<i32>} : memref<1x8x4xf32, #tpu.memory_space<vmem>>, vector<1x8x4xf32>,
    return
  }
  func.func @transform_0(%arg0: i32) -> i32 {
    %c0_i32 = arith.constant 0 : i32
    %c0_i32_0 = arith.constant 0 : i32
    return %c0_i32 : i32
  }
  func.func @transform_1(%arg0: i32) -> (i32, i32, i32) {
    %c0_i32 = arith.constant 0 : i32
    %c0_i32_0 = arith.constant 0 : i32
    %c0_i32_1 = arith.constant 0 : i32
    return %arg0, %c0_i32, %c0_i32_0 : i32, i32, i32
  }
  func.func @transform_2(%arg0: i32) -> (i32, i32, i32) {
    %c0_i32 = arith.constant 0 : i32
    %c0_i32_0 = arith.constant 0 : i32
    %c0_i32_1 = arith.constant 0 : i32
    return %arg0, %c0_i32, %c0_i32_0 : i32, i32, i32
  }
  func.func @transform_3(%arg0: i32) -> (i32, i32, i32) {
    %c0_i32 = arith.constant 0 : i32
    %c0_i32_0 = arith.constant 0 : i32
    %c0_i32_1 = arith.constant 0 : i32
    return %arg0, %c0_i32, %c0_i32_0 : i32, i32, i32
  }
}

</mosaic_0001>

<llo_original>
// kernel: tpu_custom_call.1
$region0: #{tpu_custom_call.1}
  #allocation0 [shape = 'u32[]', space=smem, size = 0x4, offset = 0x4, fixed_abs, tag = 'smem constant byte address 0x4 - core index']
  #allocation1 [shape = 'u32[144,128]{1,0:T(1,128)}', space=vmem, size = 0x12000, scoped, tag = 'internal scratch']
  #allocation2 [shape = 'f32[1]{0:T(128)S(6)}', space=smem, size = 0x200, scoped, tag = 'scoped memory for tpu_custom_call.1']
  %s0 = inlined_call_operand.<no memory space> [shape: f32[1], index: 0, kind: input, shape index: {}]
  %s1 = inlined_call_operand.hbm [shape: f32[2,8,512], index: 1, kind: input, shape index: {}]
  %s2 = inlined_call_operand.hbm [shape: f32[2,4,512], index: 2, kind: input, shape index: {}]
  %s3 = inlined_call_operand.vmem [shape: f32[2,8,4], index: 3, kind: output, shape index: {}]
  %s4 = sld [smem:[#allocation0]]
  $region53: #{tpu_custom_call.1} parent=0
    _
  %s6 = ssub.s32 1, %s4
  %s7 = scalar_select 0, %s6, %s4
  %8 = sst [smem:[#allocation2]] %s0
  $region1: #{tpu_custom_call.1} parent=0
    #allocation3 [shape = 'u8[32768]{0}', space=vmem, size = 0x8000, scoped, tag = 'input window, operand 1']
    #allocation4 [shape = 's32[2]{0}', space=sflag, size = 0x8, scoped, tag = 'scoped memory for tpu_custom_call.1']
    #allocation5 [shape = 'u8[16384]{0}', space=vmem, size = 0x4000, scoped, tag = 'input window, operand 2']
    #allocation6 [shape = 's32[2]{0}', space=sflag, size = 0x8, scoped, tag = 'scoped memory for tpu_custom_call.1']
    %9 = vsyncpa [#allocation4], 0
    %s10 = scalar_lea.sflag [#allocation4], 1
    %11 = vsyncpa %s10, 0
    %12 = vsyncpa [#allocation6], 0
    %s13 = scalar_lea.sflag [#allocation6], 1
    %14 = vsyncpa %s13, 0
    loop: start=0, step=1, limit=4
    $region2: #{tpu_custom_call.1} parent=1 // loop_pre_header
      _
    $region3: #{tpu_custom_call.1} parent=1 // loop_header
      %s16 = sphi 0, %s20
      %p17 = scmp.ge.s32.totalorder %s16, 4
      %s24 = sphi 0, %s24
      %s26 = sphi 0, %s24
      %s27 = sphi 0, %s26
      %s41 = sphi 0, %s27
      %s47 = sphi 0, %s49
      %s50 = sphi 0, %s47
      %s51 = sphi 0, %s50
      %s67 = sphi 0, %s51
      %s73 = sphi 0, %s75
      %s76 = sphi 0, %s73
      %s77 = sphi 0, %s76
      %s93 = sphi 0, %s77
      %s99 = sphi 0, %s101
      %s102 = sphi 0, %s99
      %s103 = sphi 0, %s102
      %s119 = sphi 0, %s103
    $region4: #{tpu_custom_call.1} parent=1 // loop_header_branch
      %19 = sbr.rel (%p17) target = $region8
    $region5: #{tpu_custom_call.1} parent=1 // loop_body
      %s21 = ssub.s32 %s16, 1
      %s22 = ssub.s32 %s16, 2
      %s23 = sadd.s32 %s16, 1
      %s25 = sadd.s32 %s24, 1
      %p28 = scmp.eq.s32.totalorder %s16, 1
      %p29 = scmp.ne.s32.totalorder %s24, %s26
      %p30 = scmp.eq.s32.totalorder %s16, 0
      %p31 = por %p29, %p30
      %p32 = scmp.ne.s32.totalorder %s24, %s26
      %p33 = scmp.eq.s32.totalorder %s21, 1
      %p34 = por %p32, %p33
      %p35 = scmp.ne.s32.totalorder %s26, %s27
      %p36 = scmp.eq.s32.totalorder %s21, 0
      %p37 = por %p35, %p36
      %p38 = scmp.ne.s32.totalorder %s26, %s27
      %p39 = scmp.eq.s32.totalorder %s22, 1
      %p40 = por %p38, %p39
      %p42 = scmp.ne.s32.totalorder %s27, %s41
      %p43 = scmp.eq.s32.totalorder %s22, 0
      %p44 = por %p42, %p43
      %s45 = ssub.s32 %s16, %s23
      %p46 = scmp.eq.s32.totalorder %s45, 0
      %s48 = sadd.s32 %s47, 1
      %s49 = scalar_select %p46, %s47, %s48
      %p52 = pneg %p46
      %p53 = scmp.eq.s32.totalorder %s16, 1
      %p54 = por %p52, %p53
      %p55 = scmp.ne.s32.totalorder %s47, %s50
      %p56 = scmp.eq.s32.totalorder %s16, 0
      %p57 = por %p55, %p56
      %p58 = scmp.ne.s32.totalorder %s47, %s50
      %p59 = scmp.eq.s32.totalorder %s21, 1
      %p60 = por %p58, %p59
      %p61 = scmp.ne.s32.totalorder %s50, %s51
      %p62 = scmp.eq.s32.totalorder %s21, 0
      %p63 = por %p61, %p62
      %p64 = scmp.ne.s32.totalorder %s50, %s51
      %p65 = scmp.eq.s32.totalorder %s22, 1
      %p66 = por %p64, %p65
      %p68 = scmp.ne.s32.totalorder %s51, %s67
      %p69 = scmp.eq.s32.totalorder %s22, 0
      %p70 = por %p68, %p69
      %s71 = ssub.s32 %s16, %s23
      %p72 = scmp.eq.s32.totalorder %s71, 0
      %s74 = sadd.s32 %s73, 1
      %s75 = scalar_select %p72, %s73, %s74
      %p78 = pneg %p72
      %p79 = scmp.eq.s32.totalorder %s16, 1
      %p80 = por %p78, %p79
      %p81 = scmp.ne.s32.totalorder %s73, %s76
      %p82 = scmp.eq.s32.totalorder %s16, 0
      %p83 = por %p81, %p82
      %p84 = scmp.ne.s32.totalorder %s73, %s76
      %p85 = scmp.eq.s32.totalorder %s21, 1
      %p86 = por %p84, %p85
      %p87 = scmp.ne.s32.totalorder %s76, %s77
      %p88 = scmp.eq.s32.totalorder %s21, 0
      %p89 = por %p87, %p88
      %p90 = scmp.ne.s32.totalorder %s76, %s77
      %p91 = scmp.eq.s32.totalorder %s22, 1
      %p92 = por %p90, %p91
      %p94 = scmp.ne.s32.totalorder %s77, %s93
      %p95 = scmp.eq.s32.totalorder %s22, 0
      %p96 = por %p94, %p95
      %s97 = ssub.s32 %s16, %s23
      %p98 = scmp.eq.s32.totalorder %s97, 0
      %s100 = sadd.s32 %s99, 1
      %s101 = scalar_select %p98, %s99, %s100
      %p104 = pneg %p98
      %p105 = scmp.eq.s32.totalorder %s16, 1
      %p106 = por %p104, %p105
      %p107 = scmp.ne.s32.totalorder %s99, %s102
      %p108 = scmp.eq.s32.totalorder %s16, 0
      %p109 = por %p107, %p108
      %p110 = scmp.ne.s32.totalorder %s99, %s102
      %p111 = scmp.eq.s32.totalorder %s21, 1
      %p112 = por %p110, %p111
      %p113 = scmp.ne.s32.totalorder %s102, %s103
      %p114 = scmp.eq.s32.totalorder %s21, 0
      %p115 = por %p113, %p114
      %p116 = scmp.ne.s32.totalorder %s102, %s103
      %p117 = scmp.eq.s32.totalorder %s22, 1
      %p118 = por %p116, %p117
      %p120 = scmp.ne.s32.totalorder %s103, %s119
      %p121 = scmp.eq.s32.totalorder %s22, 0
      %p122 = por %p120, %p121
      %p123 = scmp.le.s32.totalorder 1, %s16
      %p124 = scmp.lt.s32.totalorder %s16, 3
      %p125 = pnand %p123, %p124
      %p126 = pneg %p125
      // Predicated region
      $region9: #{tpu_custom_call.1} parent=5 // pred_check
        _
      $region10: #{tpu_custom_call.1} parent=5 // pred_check_branch
        %128 = sbr.rel (%p125) target = $region12
      $region11: #{tpu_custom_call.1} parent=5 // pred_region
        %s129 = ssub.s32 %s16, 1
        // Predicated region
        $region13: #{tpu_custom_call.1} parent=11 // pred_check
          %p130 = pneg %p37
        $region14: #{tpu_custom_call.1} parent=11 // pred_check_branch
          %132 = sbr.rel (%p130) target = $region16
        $region15: #{tpu_custom_call.1} parent=11 // pred_region
          _
        $region16: #{tpu_custom_call.1} parent=11 // pred_fallthru
          _
      $region12: #{tpu_custom_call.1} parent=5 // pred_fallthru
        _
      %p133 = scmp.lt.s32.totalorder %s16, 2
      // Predicated region
      $region17: #{tpu_custom_call.1} parent=5 // pred_check
        %p134 = pneg %p133
      $region18: #{tpu_custom_call.1} parent=5 // pred_check_branch
        %136 = sbr.rel (%p134) target = $region20
      $region19: #{tpu_custom_call.1} parent=5 // pred_region
        // Predicated region
        $region21: #{tpu_custom_call.1} parent=19 // pred_check
          %p137 = pneg %p57
        $region22: #{tpu_custom_call.1} parent=19 // pred_check_branch
          %139 = sbr.rel (%p137) target = $region24
        $region23: #{tpu_custom_call.1} parent=19 // pred_region
          %s140 = sand.u32 %s47, 1
          %s141 = scalar_lea.sflag [#allocation4], %s140
          %s142 = sand.u32 %s47, 1
          %s143 = smul.addr %s142, 32
          %s144 = scalar_lea.vmem [#allocation3], %s143
          %s146 = ssub.s32 512, 512
          %147 = vsyncadd %s141, %s146
          %s148 = smul.addr %s16, 4
          %s149 = smul.addr %s148, 128
          %s150 = scalar_lea.hbm %s1, %s149
          %s152 = sshll.u32 %s144, 4
          %s153 = int_to_ptr.vmem [resolvable:$true] %s152
          %155 = dma.hbm_to_vmem [thread:$0]  %s150, 512, %s153, %s141
        $region24: #{tpu_custom_call.1} parent=19 // pred_fallthru
          _
        // Predicated region
        $region25: #{tpu_custom_call.1} parent=19 // pred_check
          %p156 = pneg %p83
        $region26: #{tpu_custom_call.1} parent=19 // pred_check_branch
          %158 = sbr.rel (%p156) target = $region28
        $region27: #{tpu_custom_call.1} parent=19 // pred_region
          %s159 = sand.u32 %s73, 1
          %s160 = scalar_lea.sflag [#allocation6], %s159
          %s161 = sand.u32 %s73, 1
          %s162 = smul.addr %s161, 16
          %s163 = scalar_lea.vmem [#allocation5], %s162
          %s165 = ssub.s32 256, 256
          %166 = vsyncadd %s160, %s165
          %s167 = smul.addr %s16, 4
          %s168 = smul.addr %s167, 64
          %s169 = scalar_lea.hbm %s2, %s168
          %s171 = sshll.u32 %s163, 4
          %s172 = int_to_ptr.vmem [resolvable:$true] %s171
          %174 = dma.hbm_to_vmem [thread:$0]  %s169, 256, %s172, %s160
        $region28: #{tpu_custom_call.1} parent=19 // pred_fallthru
          _
      $region20: #{tpu_custom_call.1} parent=5 // pred_fallthru
        _
      %p175 = scmp.le.s32.totalorder 1, %s16
      %p176 = scmp.lt.s32.totalorder %s16, 3
      %p177 = pnand %p175, %p176
      %p178 = pneg %p177
      // Predicated region
      $region29: #{tpu_custom_call.1} parent=5 // pred_check
        _
      $region30: #{tpu_custom_call.1} parent=5 // pred_check_branch
        %180 = sbr.rel (%p177) target = $region32
      $region31: #{tpu_custom_call.1} parent=5 // pred_region
        %s181 = ssub.s32 %s16, 1
        %s182 = sand.u32 %s50, 1
        %s183 = scalar_lea.sflag [#allocation4], %s182
        %s184 = sand.u32 %s50, 1
        %s185 = smul.addr %s184, 32
        %s186 = scalar_lea.vmem [#allocation3], %s185
        // Predicated region
        $region33: #{tpu_custom_call.1} parent=31 // pred_check
          %p187 = pneg %p63
        $region34: #{tpu_custom_call.1} parent=31 // pred_check_branch
          %189 = sbr.rel (%p187) target = $region36
        $region35: #{tpu_custom_call.1} parent=31 // pred_region
          %190 = dma.done %s183, 512
        $region36: #{tpu_custom_call.1} parent=31 // pred_fallthru
          _
        %s191 = sand.u32 %s76, 1
        %s192 = scalar_lea.sflag [#allocation6], %s191
        %s193 = sand.u32 %s76, 1
        %s194 = smul.addr %s193, 16
        %s195 = scalar_lea.vmem [#allocation5], %s194
        // Predicated region
        $region37: #{tpu_custom_call.1} parent=31 // pred_check
          %p196 = pneg %p89
        $region38: #{tpu_custom_call.1} parent=31 // pred_check_branch
          %198 = sbr.rel (%p196) target = $region40
        $region39: #{tpu_custom_call.1} parent=31 // pred_region
          %199 = dma.done %s192, 256
        $region40: #{tpu_custom_call.1} parent=31 // pred_fallthru
          _
        %p200 = pneg %p37
        %p201 = pneg %p34
        %s202 = sand.u32 %s50, 1
        %s203 = scalar_lea.sflag [#allocation4], %s202
        %s204 = sand.u32 %s50, 1
        %s205 = smul.addr %s204, 32
        %s206 = scalar_lea.vmem [#allocation3], %s205
        %p207 = pneg %p63
        %p208 = pneg %p60
        %s209 = sand.u32 %s76, 1
        %s210 = scalar_lea.sflag [#allocation6], %s209
        %s211 = sand.u32 %s76, 1
        %s212 = smul.addr %s211, 16
        %s213 = scalar_lea.vmem [#allocation5], %s212
        %p214 = pneg %p89
        %p215 = pneg %p86
        %p216 = pneg %p115
        %p217 = pneg %p112
        %p218 = scmp.lt.s32.totalorder %s21, 1
        %s219 = scalar_select %p218, %s21, 1
        %s220 = smul.addr %s219, 8
        %s221 = scalar_lea.vmem %s3, %s220
        %p222 = scmp.lt.s32.totalorder %s21, 1
        %s223 = scalar_select %p222, %s21, 1
        %s224 = smul.addr %s223, 8
        %s225 = scalar_lea.vmem %s3, %s224
        %v226 = vld [vmem:[%s186] sm:$0xff]
        %v227 = vld [vmem:[%s186 + $0x8] sm:$0xff]
        %v228 = vld [vmem:[%s186 + $0x10] sm:$0xff]
        %v229 = vld [vmem:[%s186 + $0x18] sm:$0xff]
        %v230 = vld [vmem:[%s195] sm:$0xff]
        %v231 = vld [vmem:[%s195 + $0x8] sm:$0xff]
        %s232 = sld [smem:[#allocation2]]
        %s233 = smul.f32 %s232, 0.001953125
        %v234 = vmul.f32 %v226, %v226
        %v235 = vmul.f32 %v227, %v227
        %v236 = vmul.f32 %v228, %v228
        %v237 = vmul.f32 %v229, %v229
        %v238 = vadd.f32 %v234, %v235
        %v239 = vadd.f32 %v238, %v236
        %v240 = vadd.f32 %v239, %v237
        %241 = vadd.xlane.f32.xlu0 %v240
        %v242 = vpop.xlane.xlu0 %241
        %v243 = vmul.f32 %v230, %v230
        %v244 = vmul.f32 %v231, %v231
        %v247 = vcombine.high %v243, %v243
        %v248 = vcombine.high %v244, %v244
        %251 = vmatprep.subr.mxu0 %v247
        %252 = vmatpush1.xpose.msra.mxu0 %v243
        %253 = vmatprep.subr.mxu0 0.0
        %254 = vmatpush1.xpose.msra.mxu0 0.0
        %255 = vmatprep.subr.mxu0 0.0
        %256 = vmatpush1.xpose.msra.mxu0 0.0
        %257 = vmatprep.subr.mxu0 0.0
        %258 = vmatpush1.xpose.msra.mxu0 0.0
        %259 = vmatprep.subr.mxu0 0.0
        %260 = vmatpush1.xpose.msra.mxu0 0.0
        %261 = vmatprep.subr.mxu0 0.0
        %262 = vmatpush1.xpose.msra.mxu0 0.0
        %263 = vmatprep.subr.mxu0 0.0
        %264 = vmatpush1.xpose.msra.mxu0 0.0
        %265 = vmatprep.subr.mxu0 0.0
        %266 = vmatpush1.xpose.msra.mxu0 0.0
        %267 = vmatprep.subr.mxu0 0.0
        %268 = vmatpush1.xpose.msra.mxu0 0.0
        %269 = vmatprep.subr.mxu0 0.0
        %270 = vmatpush1.xpose.msra.mxu0 0.0
        %271 = vmatprep.subr.mxu0 0.0
        %272 = vmatpush1.xpose.msra.mxu0 0.0
        %273 = vmatprep.subr.mxu0 0.0
        %274 = vmatpush1.xpose.msra.mxu0 0.0
        %275 = vmatprep.subr.mxu0 0.0
        %276 = vmatpush1.xpose.msra.mxu0 0.0
        %277 = vmatprep.subr.mxu0 0.0
        %278 = vmatpush1.xpose.msra.mxu0 0.0
        %279 = vmatprep.subr.mxu0 0.0
        %280 = vmatpush1.xpose.msra.mxu0 0.0
        %281 = vmatprep.subr.mxu0 0.0
        %282 = vmatpush1.xpose.msra.mxu0 0.0
        %283 = vmatprep.subr.mxu0 0.0
        %284 = vmatpush1.xpose.msra.mxu0 0.0
        %285 = vmatprep.subr.mxu0 0.0
        %286 = vmatpush1.xpose.msra.mxu0 0.0
        %287 = vmatprep.subr.mxu0 0.0
        %288 = vmatpush1.xpose.msra.mxu0 0.0
        %289 = vmatprep.subr.mxu0 0.0
        %290 = vmatpush1.xpose.msra.mxu0 0.0
        %291 = vmatprep.subr.mxu0 0.0
        %292 = vmatpush1.xpose.msra.mxu0 0.0
        %293 = vmatprep.subr.mxu0 0.0
        %294 = vmatpush1.xpose.msra.mxu0 0.0
        %295 = vmatprep.subr.mxu0 0.0
        %296 = vmatpush1.xpose.msra.mxu0 0.0
        %297 = vmatprep.subr.mxu0 0.0
        %298 = vmatpush1.xpose.msra.mxu0 0.0
        %299 = vmatprep.subr.mxu0 0.0
        %300 = vmatpush1.xpose.msra.mxu0 0.0
        %301 = vmatprep.subr.mxu0 0.0
        %302 = vmatpush1.xpose.msra.mxu0 0.0
        %303 = vmatprep.subr.mxu0 0.0
        %304 = vmatpush1.xpose.msra.mxu0 0.0
        %305 = vmatprep.subr.mxu0 0.0
        %306 = vmatpush1.xpose.msra.mxu0 0.0
        %307 = vmatprep.subr.mxu0 0.0
        %308 = vmatpush1.xpose.msra.mxu0 0.0
        %309 = vmatprep.subr.mxu0 0.0
        %310 = vmatpush1.xpose.msra.mxu0 0.0
        %311 = vmatprep.subr.mxu0 0.0
        %312 = vmatpush1.xpose.msra.mxu0 0.0
        %313 = vmatprep.subr.mxu0 0.0
        %314 = vmatpush1.xpose.msra.mxu0 0.0
        %315 = vmatprep.mubr.f32.mxu0 1.0
        %316 = vmatmul.mubr.f32.gmra.mrb[0].mxu0 1.0
        %v317 = vpop.f32.mrb[0].mxu0
        %v318 = vadd.f32 0.0, %v317
        %v319 = vpop.f32.mrb[0].mxu0
        %320 = vdwg.mxu0
        %321 = vmatprep.subr.mxu0 %v248
        %322 = vmatpush1.xpose.msra.mxu0 %v244
        %323 = vmatprep.subr.mxu0 0.0
        %324 = vmatpush1.xpose.msra.mxu0 0.0
        %325 = vmatprep.subr.mxu0 0.0
        %326 = vmatpush1.xpose.msra.mxu0 0.0
        %327 = vmatprep.subr.mxu0 0.0
        %328 = vmatpush1.xpose.msra.mxu0 0.0
        %329 = vmatprep.subr.mxu0 0.0
        %330 = vmatpush1.xpose.msra.mxu0 0.0
        %331 = vmatprep.subr.mxu0 0.0
        %332 = vmatpush1.xpose.msra.mxu0 0.0
        %333 = vmatprep.subr.mxu0 0.0
        %334 = vmatpush1.xpose.msra.mxu0 0.0
        %335 = vmatprep.subr.mxu0 0.0
        %336 = vmatpush1.xpose.msra.mxu0 0.0
        %337 = vmatprep.subr.mxu0 0.0
        %338 = vmatpush1.xpose.msra.mxu0 0.0
        %339 = vmatprep.subr.mxu0 0.0
        %340 = vmatpush1.xpose.msra.mxu0 0.0
        %341 = vmatprep.subr.mxu0 0.0
        %342 = vmatpush1.xpose.msra.mxu0 0.0
        %343 = vmatprep.subr.mxu0 0.0
        %344 = vmatpush1.xpose.msra.mxu0 0.0
        %345 = vmatprep.subr.mxu0 0.0
        %346 = vmatpush1.xpose.msra.mxu0 0.0
        %347 = vmatprep.subr.mxu0 0.0
        %348 = vmatpush1.xpose.msra.mxu0 0.0
        %349 = vmatprep.subr.mxu0 0.0
        %350 = vmatpush1.xpose.msra.mxu0 0.0
        %351 = vmatprep.subr.mxu0 0.0
        %352 = vmatpush1.xpose.msra.mxu0 0.0
        %353 = vmatprep.subr.mxu0 0.0
        %354 = vmatpush1.xpose.msra.mxu0 0.0
        %355 = vmatprep.subr.mxu0 0.0
        %356 = vmatpush1.xpose.msra.mxu0 0.0
        %357 = vmatprep.subr.mxu0 0.0
        %358 = vmatpush1.xpose.msra.mxu0 0.0
        %359 = vmatprep.subr.mxu0 0.0
        %360 = vmatpush1.xpose.msra.mxu0 0.0
        %361 = vmatprep.subr.mxu0 0.0
        %362 = vmatpush1.xpose.msra.mxu0 0.0
        %363 = vmatprep.subr.mxu0 0.0
        %364 = vmatpush1.xpose.msra.mxu0 0.0
        %365 = vmatprep.subr.mxu0 0.0
        %366 = vmatpush1.xpose.msra.mxu0 0.0
        %367 = vmatprep.subr.mxu0 0.0
        %368 = vmatpush1.xpose.msra.mxu0 0.0
        %369 = vmatprep.subr.mxu0 0.0
        %370 = vmatpush1.xpose.msra.mxu0 0.0
        %371 = vmatprep.subr.mxu0 0.0
        %372 = vmatpush1.xpose.msra.mxu0 0.0
        %373 = vmatprep.subr.mxu0 0.0
        %374 = vmatpush1.xpose.msra.mxu0 0.0
        %375 = vmatprep.subr.mxu0 0.0
        %376 = vmatpush1.xpose.msra.mxu0 0.0
        %377 = vmatprep.subr.mxu0 0.0
        %378 = vmatpush1.xpose.msra.mxu0 0.0
        %379 = vmatprep.subr.mxu0 0.0
        %380 = vmatpush1.xpose.msra.mxu0 0.0
        %381 = vmatprep.subr.mxu0 0.0
        %382 = vmatpush1.xpose.msra.mxu0 0.0
        %383 = vmatprep.subr.mxu0 0.0
        %384 = vmatpush1.xpose.msra.mxu0 0.0
        %385 = vmatprep.mubr.f32.mxu0 1.0
        %386 = vmatmul.mubr.f32.gmra.mrb[0].mxu0 1.0
        %v387 = vpop.f32.mrb[0].mxu0
        %v388 = vadd.f32 %v318, %v387
        %v389 = vpop.f32.mrb[0].mxu0
        %390 = vdwg.mxu0
        %v393 = vcombine.high %v230, %v230
        %v394 = vcombine.high %v231, %v231
        %397 = vmatprep.subr.mxu0 %v393
        %398 = vmatpush1.xpose.msra.mxu0 %v230
        %399 = vmatprep.subr.mxu0 0.0
        %400 = vmatpush1.xpose.msra.mxu0 0.0
        %401 = vmatprep.subr.mxu0 0.0
        %402 = vmatpush1.xpose.msra.mxu0 0.0
        %403 = vmatprep.subr.mxu0 0.0
        %404 = vmatpush1.xpose.msra.mxu0 0.0
        %405 = vmatprep.subr.mxu0 0.0
        %406 = vmatpush1.xpose.msra.mxu0 0.0
        %407 = vmatprep.subr.mxu0 0.0
        %408 = vmatpush1.xpose.msra.mxu0 0.0
        %409 = vmatprep.subr.mxu0 0.0
        %410 = vmatpush1.xpose.msra.mxu0 0.0
        %411 = vmatprep.subr.mxu0 0.0
        %412 = vmatpush1.xpose.msra.mxu0 0.0
        %413 = vmatprep.subr.mxu0 0.0
        %414 = vmatpush1.xpose.msra.mxu0 0.0
        %415 = vmatprep.subr.mxu0 0.0
        %416 = vmatpush1.xpose.msra.mxu0 0.0
        %417 = vmatprep.subr.mxu0 0.0
        %418 = vmatpush1.xpose.msra.mxu0 0.0
        %419 = vmatprep.subr.mxu0 0.0
        %420 = vmatpush1.xpose.msra.mxu0 0.0
        %421 = vmatprep.subr.mxu0 0.0
        %422 = vmatpush1.xpose.msra.mxu0 0.0
        %423 = vmatprep.subr.mxu0 0.0
        %424 = vmatpush1.xpose.msra.mxu0 0.0
        %425 = vmatprep.subr.mxu0 0.0
        %426 = vmatpush1.xpose.msra.mxu0 0.0
        %427 = vmatprep.subr.mxu0 0.0
        %428 = vmatpush1.xpose.msra.mxu0 0.0
        %429 = vmatprep.subr.mxu0 0.0
        %430 = vmatpush1.xpose.msra.mxu0 0.0
        %431 = vmatprep.subr.mxu0 0.0
        %432 = vmatpush1.xpose.msra.mxu0 0.0
        %433 = vmatprep.subr.mxu0 0.0
        %434 = vmatpush1.xpose.msra.mxu0 0.0
        %435 = vmatprep.subr.mxu0 0.0
        %436 = vmatpush1.xpose.msra.mxu0 0.0
        %437 = vmatprep.subr.mxu0 0.0
        %438 = vmatpush1.xpose.msra.mxu0 0.0
        %439 = vmatprep.subr.mxu0 0.0
        %440 = vmatpush1.xpose.msra.mxu0 0.0
        %441 = vmatprep.subr.mxu0 0.0
        %442 = vmatpush1.xpose.msra.mxu0 0.0
        %443 = vmatprep.subr.mxu0 0.0
        %444 = vmatpush1.xpose.msra.mxu0 0.0
        %445 = vmatprep.subr.mxu0 0.0
        %446 = vmatpush1.xpose.msra.mxu0 0.0
        %447 = vmatprep.subr.mxu0 0.0
        %448 = vmatpush1.xpose.msra.mxu0 0.0
        %449 = vmatprep.subr.mxu0 0.0
        %450 = vmatpush1.xpose.msra.mxu0 0.0
        %451 = vmatprep.subr.mxu0 0.0
        %452 = vmatpush1.xpose.msra.mxu0 0.0
        %453 = vmatprep.subr.mxu0 0.0
        %454 = vmatpush1.xpose.msra.mxu0 0.0
        %455 = vmatprep.subr.mxu0 0.0
        %456 = vmatpush1.xpose.msra.mxu0 0.0
        %457 = vmatprep.subr.mxu0 0.0
        %458 = vmatpush1.xpose.msra.mxu0 0.0
        %459 = vmatprep.subr.mxu0 0.0
        %460 = vmatpush1.xpose.msra.mxu0 0.0
        %461 = vmatprep.mubr.f32.mxu0 %v227
        %462 = vmatmul.mubr.f32.gmra.mrb[0].mxu0 %v226
        %v463 = vpop.f32.mrb[0].mxu0
        %v464 = vadd.f32 0.0, %v463
        %v465 = vpop.f32.mrb[0].mxu0
        %466 = vdwg.mxu0
        %467 = vmatprep.subr.mxu0 %v394
        %468 = vmatpush1.xpose.msra.mxu0 %v231
        %469 = vmatprep.subr.mxu0 0.0
        %470 = vmatpush1.xpose.msra.mxu0 0.0
        %471 = vmatprep.subr.mxu0 0.0
        %472 = vmatpush1.xpose.msra.mxu0 0.0
        %473 = vmatprep.subr.mxu0 0.0
        %474 = vmatpush1.xpose.msra.mxu0 0.0
        %475 = vmatprep.subr.mxu0 0.0
        %476 = vmatpush1.xpose.msra.mxu0 0.0
        %477 = vmatprep.subr.mxu0 0.0
        %478 = vmatpush1.xpose.msra.mxu0 0.0
        %479 = vmatprep.subr.mxu0 0.0
        %480 = vmatpush1.xpose.msra.mxu0 0.0
        %481 = vmatprep.subr.mxu0 0.0
        %482 = vmatpush1.xpose.msra.mxu0 0.0
        %483 = vmatprep.subr.mxu0 0.0
        %484 = vmatpush1.xpose.msra.mxu0 0.0
        %485 = vmatprep.subr.mxu0 0.0
        %486 = vmatpush1.xpose.msra.mxu0 0.0
        %487 = vmatprep.subr.mxu0 0.0
        %488 = vmatpush1.xpose.msra.mxu0 0.0
        %489 = vmatprep.subr.mxu0 0.0
        %490 = vmatpush1.xpose.msra.mxu0 0.0
        %491 = vmatprep.subr.mxu0 0.0
        %492 = vmatpush1.xpose.msra.mxu0 0.0
        %493 = vmatprep.subr.mxu0 0.0
        %494 = vmatpush1.xpose.msra.mxu0 0.0
        %495 = vmatprep.subr.mxu0 0.0
        %496 = vmatpush1.xpose.msra.mxu0 0.0
        %497 = vmatprep.subr.mxu0 0.0
        %498 = vmatpush1.xpose.msra.mxu0 0.0
        %499 = vmatprep.subr.mxu0 0.0
        %500 = vmatpush1.xpose.msra.mxu0 0.0
        %501 = vmatprep.subr.mxu0 0.0
        %502 = vmatpush1.xpose.msra.mxu0 0.0
        %503 = vmatprep.subr.mxu0 0.0
        %504 = vmatpush1.xpose.msra.mxu0 0.0
        %505 = vmatprep.subr.mxu0 0.0
        %506 = vmatpush1.xpose.msra.mxu0 0.0
        %507 = vmatprep.subr.mxu0 0.0
        %508 = vmatpush1.xpose.msra.mxu0 0.0
        %509 = vmatprep.subr.mxu0 0.0
        %510 = vmatpush1.xpose.msra.mxu0 0.0
        %511 = vmatprep.subr.mxu0 0.0
        %512 = vmatpush1.xpose.msra.mxu0 0.0
        %513 = vmatprep.subr.mxu0 0.0
        %514 = vmatpush1.xpose.msra.mxu0 0.0
        %515 = vmatprep.subr.mxu0 0.0
        %516 = vmatpush1.xpose.msra.mxu0 0.0
        %517 = vmatprep.subr.mxu0 0.0
        %518 = vmatpush1.xpose.msra.mxu0 0.0
        %519 = vmatprep.subr.mxu0 0.0
        %520 = vmatpush1.xpose.msra.mxu0 0.0
        %521 = vmatprep.subr.mxu0 0.0
        %522 = vmatpush1.xpose.msra.mxu0 0.0
        %523 = vmatprep.subr.mxu0 0.0
        %524 = vmatpush1.xpose.msra.mxu0 0.0
        %525 = vmatprep.subr.mxu0 0.0
        %526 = vmatpush1.xpose.msra.mxu0 0.0
        %527 = vmatprep.subr.mxu0 0.0
        %528 = vmatpush1.xpose.msra.mxu0 0.0
        %529 = vmatprep.subr.mxu0 0.0
        %530 = vmatpush1.xpose.msra.mxu0 0.0
        %531 = vmatprep.mubr.f32.mxu0 %v229
        %532 = vmatmul.mubr.f32.gmra.mrb[0].mxu0 %v228
        %v533 = vpop.f32.mrb[0].mxu0
        %v534 = vadd.f32 %v464, %v533
        %v535 = vpop.f32.mrb[0].mxu0
        %536 = vdwg.mxu0
        %v537 = vlaneseq
        %v538 = vshrl.u32 %v537, 7
        %v539 = vsub.s32 0, %v538
        %v540 = vrot.slane %v388, %v539
        %v541 = vadd.f32 %v242, %v540
        %v542 = vmul.f32 %v534, 2.0
        %v543 = vsub.f32 %v541, %v542
        %v544 = vmax.f32 %v543, 0.0
        %v545 = vstv %s233
        %v546 = vmul.f32 %v545, %v544
        %vm547 = vcmask 31744
        %548 = vst.msk [vmem:[%s225] sm:$0xff] %vm547, %v546
        %p549 = scmp.lt.s32.totalorder %s21, 1
        %s550 = scalar_select %p549, %s21, 1
        %s551 = smul.addr %s550, 8
        %s552 = scalar_lea.vmem %s3, %s551
        // Predicated region
        $region41: #{tpu_custom_call.1} parent=31 // pred_check
          %p553 = pneg %p112
        $region42: #{tpu_custom_call.1} parent=31 // pred_check_branch
          %555 = sbr.rel (%p553) target = $region44
        $region43: #{tpu_custom_call.1} parent=31 // pred_region
          _
        $region44: #{tpu_custom_call.1} parent=31 // pred_fallthru
          _
      $region32: #{tpu_custom_call.1} parent=5 // pred_fallthru
        _
      %p556 = scmp.le.s32.totalorder 2, %s16
      // Predicated region
      $region45: #{tpu_custom_call.1} parent=5 // pred_check
        %p557 = pneg %p556
      $region46: #{tpu_custom_call.1} parent=5 // pred_check_branch
        %559 = sbr.rel (%p557) target = $region48
      $region47: #{tpu_custom_call.1} parent=5 // pred_region
        %s560 = ssub.s32 %s16, 2
        // Predicated region
        $region49: #{tpu_custom_call.1} parent=47 // pred_check
          %p561 = pneg %p118
        $region50: #{tpu_custom_call.1} parent=47 // pred_check_branch
          %563 = sbr.rel (%p561) target = $region52
        $region51: #{tpu_custom_call.1} parent=47 // pred_region
          %p564 = scmp.lt.s32.totalorder %s22, 1
          %s565 = scalar_select %p564, %s22, 1
          %s566 = smul.addr %s565, 8
          %s567 = scalar_lea.vmem %s3, %s566
        $region52: #{tpu_custom_call.1} parent=47 // pred_fallthru
          _
      $region48: #{tpu_custom_call.1} parent=5 // pred_fallthru
        _
    $region6: #{tpu_custom_call.1} parent=1 // loop_footer
      %s20 = sadd.s32 1, %s16
    $region7: #{tpu_custom_call.1} parent=1 // loop_footer_branch
      %15 = sbr.rel target = $region3
    $region8: #{tpu_custom_call.1} parent=1 // loop_exit
      _
    %568 = vsyncpa [#allocation4], 1
    %s569 = scalar_lea.sflag [#allocation4], 1
    %570 = vsyncpa %s569, 1
    %571 = vsyncpa [#allocation6], 1
    %s572 = scalar_lea.sflag [#allocation6], 1
    %573 = vsyncpa %s572, 1

</llo_original>
